<compile_context>
chip_gen: v6e
topology: v6e:2x2x1
jax: 0.10.0
libtpu: 0.0.40
codegen_flags: <defaults>
</compile_context>

<pallas_src>
import functools

import jax
import jax.numpy as jnp
from jax import lax
from jax.experimental import pallas as pl
from jax.experimental.pallas import tpu as pltpu


def _mean_pooling_kernel(x_ref, m_ref, o_ref, acc_ref, msum_ref, *,
                         seq_len, seq_tile, ragged):
    # x_ref:    (TB, TS, TH)  native dtype
    # m_ref:    (TB, 1,  TS)  native dtype (0/1 mask, zero-padded past seq_len)
    # o_ref:    (TB, 1,  TH)  float32
    # acc_ref:  (TB, 1,  TH)  f32 scratch: running masked sum of embeddings
    # msum_ref: (TB, 1,  1)   f32 scratch: running mask count
    s = pl.program_id(2)

    @pl.when(s == 0)
    def _init():
        acc_ref[...] = jnp.zeros_like(acc_ref)
        msum_ref[...] = jnp.zeros_like(msum_ref)

    x = x_ref[...]            # keep native dtype (no full-tile f32 upcast)
    m = m_ref[...]

    if ragged:
        # The last seq tile reads past S: those x values are unspecified and
        # garbage * 0-mask can still be NaN/Inf on the MXU, so zero them.
        # (One VPU select per element; VPU has ample slack - kernel is HBM bound.)
        limit = seq_len - s * seq_tile
        idx = lax.broadcasted_iota(jnp.int32, x.shape, 1)
        x = jnp.where(idx < limit, x, jnp.zeros_like(x))

    # Masked sum over this sequence tile as an MXU batched matmul, f32 accum.
    acc_ref[...] += jnp.einsum(
        "bks,bsh->bkh", m, x, preferred_element_type=jnp.float32
    )
    # Mask count for this tile (tiny lane reduce; XLU has slack).
    msum_ref[...] += jnp.sum(m.astype(jnp.float32), axis=2, keepdims=True)

    @pl.when(s == pl.num_programs(2) - 1)
    def _finalize():
        denom = jnp.maximum(msum_ref[...], 1e-9)   # torch.clamp(min=1e-9)
        o_ref[...] = (acc_ref[...] / denom).astype(o_ref.dtype)


def _largest_divisor_leq(n, cap):
    cap = max(1, min(n, cap))
    for d in range(cap, 0, -1):
        if n % d == 0:
            return d
    return 1


def mean_pooling(last_hidden_state, attention_mask, *, block_b=8):
    """Masked mean pooling over axis 1. Returns float32 of shape (B, H)."""
    B, S, H = last_hidden_state.shape
    assert attention_mask.shape == (B, S)

    x = last_hidden_state
    if not jnp.issubdtype(x.dtype, jnp.floating):
        # Keep the MXU on a float path (v7x MXU has no integer modes).
        x = x.astype(jnp.float32)
    dtype = x.dtype
    itemsize = jnp.dtype(dtype).itemsize

    x_tile_budget = 16 * 1024 * 1024   # per x tile (Pallas double-buffers it)
    vmem_limit = 48 * 1024 * 1024      # headroom under v7x's 64 MiB physical VMEM

    def x_tile_bytes(tb_, ts_, th_):
        return tb_ * ts_ * th_ * itemsize

    # ---- batch tile: a divisor of B (x is NEVER padded). Prefer >= 2 blocks
    # on this "parallel" axis so both v7x TensorCores get work.
    tb = _largest_divisor_leq(B, block_b)
    if B >= 2 and B // tb < 2:
        tb = _largest_divisor_leq(B, B // 2)

    # ---- hidden tile: full H unless we need a 2nd parallel block (B == 1).
    th = H
    if B // tb < 2 and th % 256 == 0:
        th //= 2                        # stays a multiple of 128

    # Shrink tb (then th) BEFORE the seq tile gets clamped up to 128, so one
    # x tile never blows the scoped VMEM limit even for very large H.
    min_ts = min(S, 128)
    while x_tile_bytes(tb, min_ts, th) > x_tile_budget:
        if tb > 1:
            tb = _largest_divisor_leq(B, tb // 2)
        elif th % 256 == 0:
            th //= 2
        else:
            break                       # pathological shape; limit bumped below

    # ---- sequence tile.
    if x_tile_bytes(tb, S, th) <= x_tile_budget:
        ts = S                          # whole sequence resident: no padding at all
    else:
        cap = max(1, x_tile_budget // (tb * th * itemsize))
        ts_max = max(128, (cap // 128) * 128)
        ts_max = min(ts_max, max(128, (S // 128) * 128))
        ts = 0
        for cand in range(ts_max, 0, -128):   # prefer a divisor of S: no ragged tile
            if S % cand == 0:
                ts = cand
                break
        if ts == 0:
            ts = ts_max                 # ragged last tile, masked in-kernel

    ns = pl.cdiv(S, ts)
    sp = ns * ts
    ragged = sp != S

    # Only the tiny (B, S) mask is ever padded; x streams from HBM unpadded.
    m = attention_mask.astype(dtype)
    if ragged:
        m = jnp.pad(m, ((0, 0), (0, sp - S)))
    # (B, 1, S) layout: loads directly as the MXU lhs with the contraction (S)
    # on lanes - no in-kernel lane->sublane relayout.
    m = m.reshape(B, 1, sp)

    grid = (B // tb, H // th, ns)
    vmem_limit = max(vmem_limit, 2 * x_tile_bytes(tb, ts, th) + (8 << 20))

    kernel = functools.partial(
        _mean_pooling_kernel, seq_len=S, seq_tile=ts, ragged=ragged)

    out = pl.pallas_call(
        kernel,
        out_shape=jax.ShapeDtypeStruct((B, 1, H), jnp.float32),
        grid_spec=pltpu.PrefetchScalarGridSpec(
            num_scalar_prefetch=0,
            grid=grid,
            in_specs=[
                pl.BlockSpec((tb, ts, th), lambda b, h, s: (b, s, h)),
                pl.BlockSpec((tb, 1, ts), lambda b, h, s: (b, 0, s)),
            ],
            # Output block index ignores the S axis -> accumulator-resident.
            out_specs=pl.BlockSpec((tb, 1, th), lambda b, h, s: (b, 0, h)),
            scratch_shapes=[
                pltpu.VMEM((tb, 1, th), jnp.float32),
                pltpu.VMEM((tb, 1, 1), jnp.float32),
            ],
        ),
        compiler_params=pltpu.CompilerParams(
            dimension_semantics=("parallel", "parallel", "arbitrary"),
            vmem_limit_bytes=vmem_limit,
        ),
    )(x, m)

    return out[:, 0, :]


def mean_pooling_ref(last_hidden_state, attention_mask):
    # Plain-JAX reference mirroring the PyTorch forward.
    m = attention_mask.astype(jnp.float32)[:, :, None]
    sum_embeddings = jnp.sum(last_hidden_state.astype(jnp.float32) * m, axis=1)
    sum_mask = jnp.maximum(jnp.sum(m, axis=1), 1e-9)
    return sum_embeddings / sum_mask


if __name__ == "__main__":
    B, S, H = 2, 8, 32
    key = jax.random.PRNGKey(0)
    k1, k2 = jax.random.split(key)

    last_hidden_state = jax.random.normal(k1, (B, S, H), dtype=jnp.float32)
    # Binary attention mask (some padding positions set to 0).
    attention_mask = (jax.random.uniform(k2, (B, S)) > 0.3).astype(jnp.float32)

    out = mean_pooling(last_hidden_state, attention_mask)
    out = jax.block_until_ready(out)

    ref = mean_pooling_ref(last_hidden_state, attention_mask)
    assert out.shape == (B, H)
    assert jnp.allclose(out, ref, atol=1e-5, rtol=1e-5), "mismatch vs reference"

    print("KERNEL_OK")
</pallas_src>

<mosaic_0001>
module attributes {stable_mosaic.version = 11 : i64} {
  func.func @_mean_pooling_kernel(%arg0: i32, %arg1: i32, %arg2: i32, %arg3: memref<1x8x32xf32, #tpu.memory_space<vmem>>, %arg4: memref<1x1x8xf32, #tpu.memory_space<vmem>>, %arg5: memref<1x1x32xf32, #tpu.memory_space<vmem>>, %arg6: memref<1x1x32xf32, #tpu.memory_space<vmem>>, %arg7: memref<1x1x1xf32, #tpu.memory_space<vmem>>) attributes {dimension_semantics = [#tpu.dimension_semantics<parallel>, #tpu.dimension_semantics<parallel>, #tpu.dimension_semantics<arbitrary>], iteration_bounds = array<i64: 2, 1, 1>, scalar_prefetch = 0 : i64, scratch_operands = 2 : i64, tpu.core_type = #tpu.core_type<tc>, window_params = [{transform_indices = @transform_0, window_bounds = array<i64: 1, 8, 32>}, {transform_indices = @transform_1, window_bounds = array<i64: 1, 1, 8>}, {transform_indices = @transform_2, window_bounds = array<i64: 1, 1, 32>}]} {
    %c0_i32 = arith.constant 0 : i32
    %0 = arith.cmpi eq, %arg2, %c0_i32 : i32
    %1 = arith.extui %0 : i1 to i32
    %c0_i32_0 = arith.constant 0 : i32
    %2 = arith.cmpi ne, %1, %c0_i32_0 : i32
    scf.if %2 {
      %cst_21 = arith.constant 0.000000e+00 : f32
      %17 = vector.broadcast %cst_21 : f32 to vector<1x1x32xf32>
      %c0_22 = arith.constant 0 : index
      %c0_23 = arith.constant 0 : index
      %c0_24 = arith.constant 0 : index
      %18 = vector.load %arg6[%c0_22, %c0_23, %c0_24] : memref<1x1x32xf32, #tpu.memory_space<vmem>>, vector<1x1x32xf32>
      tpu.vector_store %arg6[%c0_22, %c0_23, %c0_24], %17 {strides = array<i32>} : memref<1x1x32xf32, #tpu.memory_space<vmem>>, vector<1x1x32xf32>,
      %cst_25 = arith.constant 0.000000e+00 : f32
      %19 = vector.broadcast %cst_25 : f32 to vector<1x1x1xf32>
      %c0_26 = arith.constant 0 : index
      %c0_27 = arith.constant 0 : index
      %c0_28 = arith.constant 0 : index
      %20 = vector.load %arg7[%c0_26, %c0_27, %c0_28] : memref<1x1x1xf32, #tpu.memory_space<vmem>>, vector<1x1x1xf32>
      tpu.vector_store %arg7[%c0_26, %c0_27, %c0_28], %19 {strides = array<i32>} : memref<1x1x1xf32, #tpu.memory_space<vmem>>, vector<1x1x1xf32>,
    } else {
    }
    %c0 = arith.constant 0 : index
    %c0_1 = arith.constant 0 : index
    %c0_2 = arith.constant 0 : index
    %3 = vector.load %arg3[%c0, %c0_1, %c0_2] : memref<1x8x32xf32, #tpu.memory_space<vmem>>, vector<1x8x32xf32>
    %c0_3 = arith.constant 0 : index
    %c0_4 = arith.constant 0 : index
    %c0_5 = arith.constant 0 : index
    %4 = vector.load %arg4[%c0_3, %c0_4, %c0_5] : memref<1x1x8xf32, #tpu.memory_space<vmem>>, vector<1x1x8xf32>
    %c0_6 = arith.constant 0 : index
    %c0_7 = arith.constant 0 : index
    %c0_8 = arith.constant 0 : index
    %5 = vector.load %arg6[%c0_6, %c0_7, %c0_8] : memref<1x1x32xf32, #tpu.memory_space<vmem>>, vector<1x1x32xf32>
    "tpu.trace_start"() <{level = 10 : i32, message = "bks,bsh->bkh"}> : () -> ()
    %cst = arith.constant dense<0.000000e+00> : vector<1x1x32xf32>
    %6 = tpu.matmul %4, %3, %cst {dimension_numbers = #tpu.dot_dimension_numbers<[2], [1], [1], [2], [0, 0, 0, 1, 1, 2], [0], [0]>} : vector<1x1x8xf32>, vector<1x8x32xf32>, vector<1x1x32xf32> -> vector<1x1x32xf32>
    "tpu.trace_stop"() : () -> ()
    %7 = arith.addf %5, %6 : vector<1x1x32xf32>
    %c0_9 = arith.constant 0 : index
    %c0_10 = arith.constant 0 : index
    %c0_11 = arith.constant 0 : index
    %8 = vector.load %arg6[%c0_9, %c0_10, %c0_11] : memref<1x1x32xf32, #tpu.memory_space<vmem>>, vector<1x1x32xf32>
    tpu.vector_store %arg6[%c0_9, %c0_10, %c0_11], %7 {strides = array<i32>} : memref<1x1x32xf32, #tpu.memory_space<vmem>>, vector<1x1x32xf32>,
    %c0_12 = arith.constant 0 : index
    %c0_13 = arith.constant 0 : index
    %c0_14 = arith.constant 0 : index
    %9 = vector.load %arg7[%c0_12, %c0_13, %c0_14] : memref<1x1x1xf32, #tpu.memory_space<vmem>>, vector<1x1x1xf32>
    %cst_15 = arith.constant dense<0.000000e+00> : vector<1x1xf32>
    %10 = vector.multi_reduction <add>, %4, %cst_15 [2] : vector<1x1x8xf32> to vector<1x1xf32>
    %11 = vector.shape_cast %10 : vector<1x1xf32> to vector<1x1x1xf32>
    %12 = arith.addf %9, %11 : vector<1x1x1xf32>
    %c0_16 = arith.constant 0 : index
    %c0_17 = arith.constant 0 : index
    %c0_18 = arith.constant 0 : index
    %13 = vector.load %arg7[%c0_16, %c0_17, %c0_18] : memref<1x1x1xf32, #tpu.memory_space<vmem>>, vector<1x1x1xf32>
    tpu.vector_store %arg7[%c0_16, %c0_17, %c0_18], %12 {strides = array<i32>} : memref<1x1x1xf32, #tpu.memory_space<vmem>>, vector<1x1x1xf32>,
    %c0_i32_19 = arith.constant 0 : i32
    %14 = arith.cmpi eq, %arg2, %c0_i32_19 : i32
    %15 = arith.extui %14 : i1 to i32
    %c0_i32_20 = arith.constant 0 : i32
    %16 = arith.cmpi ne, %15, %c0_i32_20 : i32
    scf.if %16 {
      %c0_21 = arith.constant 0 : index
      %c0_22 = arith.constant 0 : index
      %c0_23 = arith.constant 0 : index
      %17 = vector.load %arg7[%c0_21, %c0_22, %c0_23] : memref<1x1x1xf32, #tpu.memory_space<vmem>>, vector<1x1x1xf32>
      %cst_24 = arith.constant 9.99999971E-10 : f32
      %18 = vector.broadcast %cst_24 : f32 to vector<1x1x1xf32>
      %19 = arith.maximumf %17, %18 : vector<1x1x1xf32>
      %c0_25 = arith.constant 0 : index
      %c0_26 = arith.constant 0 : index
      %c0_27 = arith.constant 0 : index
      %20 = vector.load %arg6[%c0_25, %c0_26, %c0_27] : memref<1x1x32xf32, #tpu.memory_space<vmem>>, vector<1x1x32xf32>
      %21 = vector.broadcast %19 : vector<1x1x1xf32> to vector<1x1x32xf32>
      %22 = arith.divf %20, %21 : vector<1x1x32xf32>
      %c0_28 = arith.constant 0 : index
      %c0_29 = arith.constant 0 : index
      %c0_30 = arith.constant 0 : index
      %23 = vector.load %arg5[%c0_28, %c0_29, %c0_30] : memref<1x1x32xf32, #tpu.memory_space<vmem>>, vector<1x1x32xf32>
      tpu.vector_store %arg5[%c0_28, %c0_29, %c0_30], %22 {strides = array<i32>} : memref<1x1x32xf32, #tpu.memory_space<vmem>>, vector<1x1x32xf32>,
    } else {
    }
    return
  }
  func.func @transform_0(%arg0: i32, %arg1: i32, %arg2: i32) -> (i32, i32, i32) {
    %c0_i32 = arith.constant 0 : i32
    return %arg0, %arg2, %arg1 : i32, i32, i32
  }
  func.func @transform_1(%arg0: i32, %arg1: i32, %arg2: i32) -> (i32, i32, i32) {
    %c0_i32 = arith.constant 0 : i32
    %c0_i32_0 = arith.constant 0 : i32
    return %arg0, %c0_i32, %arg2 : i32, i32, i32
  }
  func.func @transform_2(%arg0: i32, %arg1: i32, %arg2: i32) -> (i32, i32, i32) {
    %c0_i32 = arith.constant 0 : i32
    %c0_i32_0 = arith.constant 0 : i32
    return %arg0, %c0_i32, %arg1 : i32, i32, i32
  }
}

</mosaic_0001>

<llo_original>
// kernel: tpu_custom_call.1
$region0: #{tpu_custom_call.1}
  #allocation0 [shape = 'u32[]', space=smem, size = 0x4, offset = 0x4, fixed_abs, tag = 'smem constant byte address 0x4 - core index']
  #allocation1 [shape = 'u32[144,128]{1,0:T(1,128)}', space=vmem, size = 0x12000, scoped, tag = 'internal scratch']
  #allocation2 [shape = 'f32[1,1,32]{2,1,0:T(1,128)}', space=vmem, size = 0x200, scoped, tag = 'scratch operand']
  #allocation3 [shape = 'f32[1,1,1]{2,1,0:T(1,128)}', space=vmem, size = 0x200, scoped, tag = 'scratch operand']
  %s0 = inlined_call_operand.hbm [shape: f32[2,8,32], index: 0, kind: input, shape index: {}]
  %s1 = inlined_call_operand.hbm [shape: f32[2,1,8], index: 1, kind: input, shape index: {}]
  %s2 = inlined_call_operand.hbm [shape: f32[2,1,32], index: 2, kind: output, shape index: {}]
  %s3 = sld [smem:[#allocation0]]
  $region57: #{tpu_custom_call.1} parent=0
    _
  %s5 = ssub.s32 1, %s3
  %s6 = scalar_select 0, %s5, %s3
  $region1: #{tpu_custom_call.1} parent=0
    #allocation4 [shape = 'u8[8192]{0}', space=vmem, size = 0x2000, scoped, tag = 'input window, operand 0']
    #allocation5 [shape = 's32[2]{0}', space=sflag, size = 0x8, scoped, tag = 'scoped memory for tpu_custom_call.1']
    #allocation6 [shape = 's32[2]{0}', space=sflag, size = 0x8, scoped, tag = 'scoped memory for tpu_custom_call.1']
    #allocation7 [shape = 'u8[1024]{0}', space=vmem, size = 0x400, scoped, tag = 'input window, operand 1']
    #allocation8 [shape = 's32[2]{0}', space=sflag, size = 0x8, scoped, tag = 'scoped memory for tpu_custom_call.1']
    #allocation9 [shape = 'u8[1024]{0}', space=vmem, size = 0x400, scoped, tag = 'output window, operand 0']
    %7 = vsyncpa [#allocation5], 0
    %s8 = scalar_lea.sflag [#allocation5], 1
    %9 = vsyncpa %s8, 0
    %10 = vsyncpa [#allocation8], 0
    %s11 = scalar_lea.sflag [#allocation8], 1
    %12 = vsyncpa %s11, 0
    %13 = vsyncpa [#allocation6], 0
    %s14 = scalar_lea.sflag [#allocation6], 1
    %15 = vsyncpa %s14, 0
    loop: start=0, step=1, limit=4
    $region2: #{tpu_custom_call.1} parent=1 // loop_pre_header
      _
    $region3: #{tpu_custom_call.1} parent=1 // loop_header
      %s17 = sphi 0, %s21
      %p18 = scmp.ge.s32.totalorder %s17, 4
      %s24 = sphi 0, %s43
      %s25 = sphi 0, %s39
      %s26 = sphi 0, %s35
      %s27 = sphi 0, %s24
      %s28 = sphi 0, %s25
      %s29 = sphi 0, %s26
      %s30 = sphi 0, %s27
      %s31 = sphi 0, %s28
      %s32 = sphi 0, %s29
      %s50 = sphi 0, %s52
      %s53 = sphi 0, %s50
      %s54 = sphi 0, %s53
      %s70 = sphi 0, %s54
      %s78 = sphi 0, %s80
      %s81 = sphi 0, %s78
      %s82 = sphi 0, %s81
      %s98 = sphi 0, %s82
      %s106 = sphi 0, %s108
      %s109 = sphi 0, %s106
      %s110 = sphi 0, %s109
      %s126 = sphi 0, %s110
    $region4: #{tpu_custom_call.1} parent=1 // loop_header_branch
      %20 = sbr.rel (%p18) target = $region8
    $region5: #{tpu_custom_call.1} parent=1 // loop_body
      %s22 = ssub.s32 %s17, 1
      %s23 = ssub.s32 %s17, 2
      %s33 = sadd.s32 1, %s26
      %p34 = scmp.ge.s32.totalorder %s33, 1
      %s35 = scalar_select %p34, 0, %s33
      %s36 = sadd.s32 1, %s25
      %s37 = scalar_select %p34, %s36, %s25
      %p38 = scmp.ge.s32.totalorder %s37, 1
      %s39 = scalar_select %p38, 0, %s37
      %s40 = sadd.s32 1, %s24
      %s41 = scalar_select %p38, %s40, %s24
      %p42 = scmp.ge.s32.totalorder %s41, 2
      %s43 = scalar_select %p42, 0, %s41
      %s44 = ssub.s32 %s24, %s43
      %s45 = ssub.s32 %s26, %s35
      %s46 = sor.u32 %s44, %s45
      %s47 = ssub.s32 %s25, %s39
      %s48 = sor.u32 %s46, %s47
      %p49 = scmp.eq.s32.totalorder %s48, 0
      %s51 = sadd.s32 %s50, 1
      %s52 = scalar_select %p49, %s50, %s51
      %p55 = pneg %p49
      %p56 = scmp.eq.s32.totalorder %s17, 1
      %p57 = por %p55, %p56
      %p58 = scmp.ne.s32.totalorder %s50, %s53
      %p59 = scmp.eq.s32.totalorder %s17, 0
      %p60 = por %p58, %p59
      %p61 = scmp.ne.s32.totalorder %s50, %s53
      %p62 = scmp.eq.s32.totalorder %s22, 1
      %p63 = por %p61, %p62
      %p64 = scmp.ne.s32.totalorder %s53, %s54
      %p65 = scmp.eq.s32.totalorder %s22, 0
      %p66 = por %p64, %p65
      %p67 = scmp.ne.s32.totalorder %s53, %s54
      %p68 = scmp.eq.s32.totalorder %s23, 1
      %p69 = por %p67, %p68
      %p71 = scmp.ne.s32.totalorder %s54, %s70
      %p72 = scmp.eq.s32.totalorder %s23, 0
      %p73 = por %p71, %p72
      %s74 = ssub.s32 %s24, %s43
      %s75 = ssub.s32 %s26, %s35
      %s76 = sor.u32 %s74, %s75
      %p77 = scmp.eq.s32.totalorder %s76, 0
      %s79 = sadd.s32 %s78, 1
      %s80 = scalar_select %p77, %s78, %s79
      %p83 = pneg %p77
      %p84 = scmp.eq.s32.totalorder %s17, 1
      %p85 = por %p83, %p84
      %p86 = scmp.ne.s32.totalorder %s78, %s81
      %p87 = scmp.eq.s32.totalorder %s17, 0
      %p88 = por %p86, %p87
      %p89 = scmp.ne.s32.totalorder %s78, %s81
      %p90 = scmp.eq.s32.totalorder %s22, 1
      %p91 = por %p89, %p90
      %p92 = scmp.ne.s32.totalorder %s81, %s82
      %p93 = scmp.eq.s32.totalorder %s22, 0
      %p94 = por %p92, %p93
      %p95 = scmp.ne.s32.totalorder %s81, %s82
      %p96 = scmp.eq.s32.totalorder %s23, 1
      %p97 = por %p95, %p96
      %p99 = scmp.ne.s32.totalorder %s82, %s98
      %p100 = scmp.eq.s32.totalorder %s23, 0
      %p101 = por %p99, %p100
      %s102 = ssub.s32 %s24, %s43
      %s103 = ssub.s32 %s25, %s39
      %s104 = sor.u32 %s102, %s103
      %p105 = scmp.eq.s32.totalorder %s104, 0
      %s107 = sadd.s32 %s106, 1
      %s108 = scalar_select %p105, %s106, %s107
      %p111 = pneg %p105
      %p112 = scmp.eq.s32.totalorder %s17, 1
      %p113 = por %p111, %p112
      %p114 = scmp.ne.s32.totalorder %s106, %s109
      %p115 = scmp.eq.s32.totalorder %s17, 0
      %p116 = por %p114, %p115
      %p117 = scmp.ne.s32.totalorder %s106, %s109
      %p118 = scmp.eq.s32.totalorder %s22, 1
      %p119 = por %p117, %p118
      %p120 = scmp.ne.s32.totalorder %s109, %s110
      %p121 = scmp.eq.s32.totalorder %s22, 0
      %p122 = por %p120, %p121
      %p123 = scmp.ne.s32.totalorder %s109, %s110
      %p124 = scmp.eq.s32.totalorder %s23, 1
      %p125 = por %p123, %p124
      %p127 = scmp.ne.s32.totalorder %s110, %s126
      %p128 = scmp.eq.s32.totalorder %s23, 0
      %p129 = por %p127, %p128
      %p130 = scmp.le.s32.totalorder 1, %s17
      %p131 = scmp.lt.s32.totalorder %s17, 3
      %p132 = pnand %p130, %p131
      %p133 = pneg %p132
      // Predicated region
      $region9: #{tpu_custom_call.1} parent=5 // pred_check
        _
      $region10: #{tpu_custom_call.1} parent=5 // pred_check_branch
        %135 = sbr.rel (%p132) target = $region12
      $region11: #{tpu_custom_call.1} parent=5 // pred_region
        %s136 = ssub.s32 %s17, 1
      $region12: #{tpu_custom_call.1} parent=5 // pred_fallthru
        _
      %p137 = scmp.lt.s32.totalorder %s17, 2
      // Predicated region
      $region13: #{tpu_custom_call.1} parent=5 // pred_check
        %p138 = pneg %p137
      $region14: #{tpu_custom_call.1} parent=5 // pred_check_branch
        %140 = sbr.rel (%p138) target = $region16
      $region15: #{tpu_custom_call.1} parent=5 // pred_region
        // Predicated region
        $region17: #{tpu_custom_call.1} parent=15 // pred_check
          %p141 = pneg %p60
        $region18: #{tpu_custom_call.1} parent=15 // pred_check_branch
          %143 = sbr.rel (%p141) target = $region20
        $region19: #{tpu_custom_call.1} parent=15 // pred_region
          %s144 = sand.u32 %s50, 1
          %s145 = scalar_lea.sflag [#allocation5], %s144
          %s146 = sand.u32 %s50, 1
          %s147 = smul.addr %s146, 8
          %s148 = scalar_lea.vmem [#allocation4], %s147
          %s150 = ssub.s32 128, 128
          %151 = vsyncadd %s145, %s150
          %s152 = sadd.s32 %s25, %s26
          %s153 = sadd.s32 %s152, %s24
          %s154 = smul.addr %s153, 128
          %s155 = scalar_lea.hbm %s0, %s154
          %s157 = sshll.u32 %s148, 4
          %s158 = int_to_ptr.vmem [resolvable:$true] %s157
          %160 = dma.hbm_to_vmem [thread:$0]  %s155, 128, %s158, %s145
        $region20: #{tpu_custom_call.1} parent=15 // pred_fallthru
          _
        // Predicated region
        $region21: #{tpu_custom_call.1} parent=15 // pred_check
          %p161 = pneg %p88
        $region22: #{tpu_custom_call.1} parent=15 // pred_check_branch
          %163 = sbr.rel (%p161) target = $region24
        $region23: #{tpu_custom_call.1} parent=15 // pred_region
          %s164 = sand.u32 %s78, 1
          %s165 = scalar_lea.sflag [#allocation8], %s164
          %s166 = sand.u32 %s78, 1
          %s167 = scalar_lea.vmem [#allocation7], %s166
          %s169 = ssub.s32 16, 16
          %170 = vsyncadd %s165, %s169
          %s171 = sadd.s32 %s26, %s24
          %s172 = smul.addr %s171, 16
          %s173 = scalar_lea.hbm %s1, %s172
          %s175 = sshll.u32 %s167, 4
          %s176 = int_to_ptr.vmem [resolvable:$true] %s175
          %178 = dma.hbm_to_vmem [thread:$0]  %s173, 16, %s176, %s165
        $region24: #{tpu_custom_call.1} parent=15 // pred_fallthru
          _
      $region16: #{tpu_custom_call.1} parent=5 // pred_fallthru
        _
      %p179 = scmp.le.s32.totalorder 1, %s17
      %p180 = scmp.lt.s32.totalorder %s17, 3
      %p181 = pnand %p179, %p180
      %p182 = pneg %p181
      // Predicated region
      $region25: #{tpu_custom_call.1} parent=5 // pred_check
        _
      $region26: #{tpu_custom_call.1} parent=5 // pred_check_branch
        %184 = sbr.rel (%p181) target = $region28
      $region27: #{tpu_custom_call.1} parent=5 // pred_region
        %s185 = ssub.s32 %s17, 1
        %s186 = sand.u32 %s53, 1
        %s187 = scalar_lea.sflag [#allocation5], %s186
        %s188 = sand.u32 %s53, 1
        %s189 = smul.addr %s188, 8
        %s190 = scalar_lea.vmem [#allocation4], %s189
        // Predicated region
        $region29: #{tpu_custom_call.1} parent=27 // pred_check
          %p191 = pneg %p66
        $region30: #{tpu_custom_call.1} parent=27 // pred_check_branch
          %193 = sbr.rel (%p191) target = $region32
        $region31: #{tpu_custom_call.1} parent=27 // pred_region
          %194 = dma.done %s187, 128
        $region32: #{tpu_custom_call.1} parent=27 // pred_fallthru
          _
        %s195 = sand.u32 %s81, 1
        %s196 = scalar_lea.sflag [#allocation8], %s195
        %s197 = sand.u32 %s81, 1
        %s198 = scalar_lea.vmem [#allocation7], %s197
        // Predicated region
        $region33: #{tpu_custom_call.1} parent=27 // pred_check
          %p199 = pneg %p94
        $region34: #{tpu_custom_call.1} parent=27 // pred_check_branch
          %201 = sbr.rel (%p199) target = $region36
        $region35: #{tpu_custom_call.1} parent=27 // pred_region
          %202 = dma.done %s196, 16
        $region36: #{tpu_custom_call.1} parent=27 // pred_fallthru
          _
        %s203 = sand.u32 %s53, 1
        %s204 = scalar_lea.sflag [#allocation5], %s203
        %s205 = sand.u32 %s53, 1
        %s206 = smul.addr %s205, 8
        %s207 = scalar_lea.vmem [#allocation4], %s206
        %p208 = pneg %p66
        %p209 = pneg %p63
        %s210 = sand.u32 %s81, 1
        %s211 = scalar_lea.sflag [#allocation8], %s210
        %s212 = sand.u32 %s81, 1
        %s213 = scalar_lea.vmem [#allocation7], %s212
        %p214 = pneg %p94
        %p215 = pneg %p91
        %p216 = pneg %p122
        %p217 = pneg %p119
        %s218 = sand.u32 %s109, 1
        %s219 = scalar_lea.sflag [#allocation6], %s218
        %s220 = sand.u32 %s109, 1
        %s221 = scalar_lea.vmem [#allocation9], %s220
        %p222 = scmp.eq.s32.totalorder %s29, 0
        // Predicated region
        $region37: #{tpu_custom_call.1} parent=27 // pred_check
          %p223 = pneg %p222
        $region38: #{tpu_custom_call.1} parent=27 // pred_check_branch
          %225 = sbr.rel (%p223) target = $region40
        $region39: #{tpu_custom_call.1} parent=27 // pred_region
          %vm226 = vcmask 253952
          %227 = vst.msk [vmem:[#allocation2] sm:$0x1] %vm226, 0.0
          %vm228 = vcmask 0
          %229 = vst.msk [vmem:[#allocation3] sm:$0x1] %vm228, 0.0
        $region40: #{tpu_custom_call.1} parent=27 // pred_fallthru
          _
        %v230 = vld [vmem:[%s190] sm:$0xff]
        %v231 = vld [vmem:[%s198] sm:$0x1]
        %v232 = vld [vmem:[#allocation2] sm:$0x1]
        %vm233 = vcmask 64512
        %v235 = vsel %vm233, %v231, 0
        %237 = vmatprep.subr.mxu0 0.0
        %238 = vmatpush1.msra.mxu0 0.0
        %239 = vmatprep.subr.mxu0 0.0
        %240 = vmatpush1.msra.mxu0 0.0
        %241 = vmatprep.subr.mxu0 0.0
        %242 = vmatpush1.msra.mxu0 0.0
        %243 = vmatprep.subr.mxu0 0.0
        %244 = vmatpush1.msra.mxu0 0.0
        %245 = vmatprep.subr.mxu0 0.0
        %246 = vmatpush1.msra.mxu0 0.0
        %247 = vmatprep.subr.mxu0 0.0
        %248 = vmatpush1.msra.mxu0 0.0
        %249 = vmatprep.subr.mxu0 0.0
        %250 = vmatpush1.msra.mxu0 0.0
        %251 = vmatprep.subr.mxu0 0.0
        %252 = vmatpush1.msra.mxu0 0.0
        %253 = vmatprep.subr.mxu0 0.0
        %254 = vmatpush1.msra.mxu0 0.0
        %255 = vmatprep.subr.mxu0 0.0
        %256 = vmatpush1.msra.mxu0 0.0
        %257 = vmatprep.subr.mxu0 0.0
        %258 = vmatpush1.msra.mxu0 0.0
        %259 = vmatprep.subr.mxu0 0.0
        %260 = vmatpush1.msra.mxu0 0.0
        %261 = vmatprep.subr.mxu0 0.0
        %262 = vmatpush1.msra.mxu0 0.0
        %263 = vmatprep.subr.mxu0 0.0
        %264 = vmatpush1.msra.mxu0 0.0
        %265 = vmatprep.subr.mxu0 0.0
        %266 = vmatpush1.msra.mxu0 0.0
        %267 = vmatprep.subr.mxu0 0.0
        %268 = vmatpush1.msra.mxu0 %v230
        %269 = vmatprep.subr.mxu0 0.0
        %270 = vmatpush2.msra.mxu0 0.0
        %271 = vmatprep.subr.mxu0 0.0
        %272 = vmatpush2.msra.mxu0 0.0
        %273 = vmatprep.subr.mxu0 0.0
        %274 = vmatpush2.msra.mxu0 0.0
        %275 = vmatprep.subr.mxu0 0.0
        %276 = vmatpush2.msra.mxu0 0.0
        %277 = vmatprep.subr.mxu0 0.0
        %278 = vmatpush2.msra.mxu0 0.0
        %279 = vmatprep.subr.mxu0 0.0
        %280 = vmatpush2.msra.mxu0 0.0
        %281 = vmatprep.subr.mxu0 0.0
        %282 = vmatpush2.msra.mxu0 0.0
        %283 = vmatprep.subr.mxu0 0.0
        %284 = vmatpush2.msra.mxu0 0.0
        %285 = vmatprep.subr.mxu0 0.0
        %286 = vmatpush2.msra.mxu0 0.0
        %287 = vmatprep.subr.mxu0 0.0
        %288 = vmatpush2.msra.mxu0 0.0
        %289 = vmatprep.subr.mxu0 0.0
        %290 = vmatpush2.msra.mxu0 0.0
        %291 = vmatprep.subr.mxu0 0.0
        %292 = vmatpush2.msra.mxu0 0.0
        %293 = vmatprep.subr.mxu0 0.0
        %294 = vmatpush2.msra.mxu0 0.0
        %295 = vmatprep.subr.mxu0 0.0
        %296 = vmatpush2.msra.mxu0 0.0
        %297 = vmatprep.subr.mxu0 0.0
        %298 = vmatpush2.msra.mxu0 0.0
        %299 = vmatprep.subr.mxu0 0.0
        %300 = vmatpush2.msra.mxu0 0.0
        %301 = vmatprep.mubr.f32.mxu0 0.0
        %302 = vmatmul.mubr.f32.gmra.mxu0 %v235
        %v303 = vpop.f32.mrf.mxu0
        %v304 = vadd.f32 0.0, %v303
        %v305 = vpop.f32.mrf.mxu0
        %306 = vdwg.mxu0
        %v307 = vadd.f32 %v232, %v304
        %vm308 = vcmask 253952
        %309 = vst.msk [vmem:[#allocation2] sm:$0x1] %vm308, %v307
        %v310 = vld [vmem:[#allocation3] sm:$0x1]
        %vm311 = vcmask 57344
        %v312 = vsel %vm311, %v231, 0.0
        %313 = vadd.xlane.f32.xlu0 %v312
        %v314 = vpop.xlane.xlu0 %313
        %v315 = vadd.f32 %v310, %v314
        %vm316 = vcmask 0
        %317 = vst.msk [vmem:[#allocation3] sm:$0x1] %vm316, %v315
        // Predicated region
        $region41: #{tpu_custom_call.1} parent=27 // pred_check
          %p318 = pneg %p222
        $region42: #{tpu_custom_call.1} parent=27 // pred_check_branch
          %320 = sbr.rel (%p318) target = $region44
        $region43: #{tpu_custom_call.1} parent=27 // pred_region
          %v321 = vld [vmem:[#allocation3] sm:$0x1]
          %v322 = vmax.f32 %v321, 1e-09
          %v323 = vld [vmem:[#allocation2] sm:$0x1]
          %325 = vset.pattern.permute.xlu0 0
          %326 = vperm.xlu0 %325, %v322
          %v327 = vpop.permute.xlu0 %326
          %v329 = vlaneseq
          %v330 = vshrl.u32 %v329, 7
          %v331 = vsub.s32 0, %v330
          %v332 = vrot.slane %v327, %v331
          %v333 = vrcp.pop %v332
          %v334 = vmul.f32 %v323, %v333
          %335 = vst.msk [vmem:[%s221] sm:$0x1] %vm308, %v334
        $region44: #{tpu_custom_call.1} parent=27 // pred_fallthru
          _
        %s336 = sand.u32 %s109, 1
        %s337 = scalar_lea.sflag [#allocation6], %s336
        %s338 = sand.u32 %s109, 1
        %s339 = scalar_lea.vmem [#allocation9], %s338
        // Predicated region
        $region45: #{tpu_custom_call.1} parent=27 // pred_check
          %p340 = pneg %p119
        $region46: #{tpu_custom_call.1} parent=27 // pred_check_branch
          %342 = sbr.rel (%p340) target = $region48
        $region47: #{tpu_custom_call.1} parent=27 // pred_region
          %s344 = ssub.s32 16, 16
          %345 = vsyncadd %s337, %s344
          %s346 = sadd.s32 %s28, %s27
          %s347 = smul.addr %s346, 16
          %s348 = scalar_lea.hbm %s2, %s347
          %s350 = sshll.u32 %s339, 4
          %s351 = int_to_ptr.vmem [resolvable:$true] %s350
          %353 = dma.vmem_to_hbm [thread:$0]  %s351, 16, %s348, %s337
        $region48: #{tpu_custom_call.1} parent=27 // pred_fallthru
          _
      $region28: #{tpu_custom_call.1} parent=5 // pred_fallthru
        _
      %p354 = scmp.le.s32.totalorder 2, %s17
      // Predicated region
      $region49: #{tpu_custom_call.1} parent=5 // pred_check
        %p355 = pneg %p354
      $region50: #{tpu_custom_call.1} parent=5 // pred_check_branch
        %357 = sbr.rel (%p355) target = $region52
      $region51: #{tpu_custom_call.1} parent=5 // pred_region
        %s358 = ssub.s32 %s17, 2
        // Predicated region
        $region53: #{tpu_custom_call.1} parent=51 // pred_check
          %p359 = pneg %p125
        $region54: #{tpu_custom_call.1} parent=51 // pred_check_branch
          %361 = sbr.rel (%p359) target = $region56
        $region55: #{tpu_custom_call.1} parent=51 // pred_region
          %s362 = sand.u32 %s110, 1
          %s363 = scalar_lea.sflag [#allocation6], %s362
          %s364 = sand.u32 %s110, 1
          %s365 = scalar_lea.vmem [#allocation9], %s364
          %366 = dma.done %s363, 16
        $region56: #{tpu_custom_call.1} parent=51 // pred_fallthru
          _
      $region52: #{tpu_custom_call.1} parent=5 // pred_fallthru
        _
    $region6: #{tpu_custom_call.1} parent=1 // loop_footer
      %s21 = sadd.s32 1, %s17
    $region7: #{tpu_custom_call.1} parent=1 // loop_footer_branch
      %16 = sbr.rel target = $region3
    $region8: #{tpu_custom_call.1} parent=1 // loop_exit
      _
    %367 = vsyncpa [#allocation5], 1
    %s368 = scalar_lea.sflag [#allocation5], 1
    %369 = vsyncpa %s368, 1
    %370 = vsyncpa [#allocation8], 1
    %s371 = scalar_lea.sflag [#allocation8], 1
    %372 = vsyncpa %s371, 1
    %373 = vsyncpa [#allocation6], 1
    %s374 = scalar_lea.sflag [#allocation6], 1
    %375 = vsyncpa %s374, 1

</llo_original>
